<compile_context>
chip_gen: v6e
topology: v6e:2x2x1
jax: 0.10.0
libtpu: 0.0.40
codegen_flags: <defaults>
</compile_context>

<pallas_src>
import functools

import jax
import jax.numpy as jnp
from jax.experimental import pallas as pl
from jax.experimental.pallas import tpu as pltpu  # noqa: F401  (kept for TPU-specific params if needed)

BN_EPS = 1e-5


def block_kernel(w_ref, p_ref, gamma_ref, beta_ref, o_ref, *, m_valid):
    # w_ref:     (Cout, K)   flattened conv weights
    # p_ref:     (K, Mp)     transposed im2col patches, zero-padded in [M, Mp)
    # gamma_ref: (Cout, 1)   BN affine scale
    # beta_ref:  (Cout, 1)   BN affine shift
    # o_ref:     (Cout, Mp)  lane-dense output (M on the 128-lane axis)
    conv = jnp.dot(w_ref[...], p_ref[...],
                   preferred_element_type=jnp.float32)            # (Cout, Mp)

    inv_m = 1.0 / m_valid
    # Padded columns of p_ref are zero => conv is exactly 0 there, so the raw
    # sum over Mp equals the sum over the M valid columns.
    mean = jnp.sum(conv, axis=1, keepdims=True) * inv_m            # (Cout, 1)

    col = jax.lax.broadcasted_iota(jnp.int32, conv.shape, 1)
    centered = jnp.where(col < m_valid, conv - mean, 0.0)
    var = jnp.sum(centered * centered, axis=1, keepdims=True) * inv_m  # biased

    # Fused BN affine: one FMA per element on the big tile.
    scale = gamma_ref[...] * jax.lax.rsqrt(var + BN_EPS)           # (Cout, 1)
    shift = beta_ref[...] - mean * scale                           # (Cout, 1)
    o_ref[...] = jnp.maximum(conv * scale + shift, 0.0)


def block_forward(x, conv_w, gamma, beta):
    """x: (N, 1, H, W) float32; conv_w: (32, 1, 3, 3); gamma/beta: (32,)."""
    n, cin, h, w = x.shape
    cout, cin_w, kh, kw = conv_w.shape
    assert cin == 1 and cin_w == 1
    ho, wo = h - kh + 1, w - kw + 1
    m = n * ho * wo
    mp = max(128, ((m + 127) // 128) * 128)  # lane-dense padded M

    # Transposed patch matrix (K, Mp): the 9 taps on sublanes, the flattened
    # output position (n, ho, wo) on the lane axis.  Tap order is kh-major,
    # kw-minor to match the flattened torch weight (Cout, Cin, kh, kw).
    taps = [x[:, 0, i:i + ho, j:j + wo] for i in range(kh) for j in range(kw)]
    patches_t = jnp.stack(taps, axis=0).reshape(kh * kw, m)
    patches_t = jnp.pad(patches_t, ((0, 0), (0, mp - m))).astype(jnp.float32)

    w_mat = conv_w.reshape(cout, cin * kh * kw).astype(jnp.float32)   # (Cout, K)
    gamma2 = gamma.reshape(cout, 1).astype(jnp.float32)
    beta2 = beta.reshape(cout, 1).astype(jnp.float32)

    kern = functools.partial(block_kernel, m_valid=m)
    out_t = pl.pallas_call(
        kern,
        out_shape=jax.ShapeDtypeStruct((cout, mp), jnp.float32),
        in_specs=[
            pl.BlockSpec((cout, kh * kw), lambda: (0, 0)),
            pl.BlockSpec((kh * kw, mp), lambda: (0, 0)),
            pl.BlockSpec((cout, 1), lambda: (0, 0)),
            pl.BlockSpec((cout, 1), lambda: (0, 0)),
        ],
        out_specs=pl.BlockSpec((cout, mp), lambda: (0, 0)),
    )(w_mat, patches_t, gamma2, beta2)

    # (Cout, M) -> (Cout, N, Ho, Wo) -> NCHW
    return out_t[:, :m].reshape(cout, n, ho, wo).transpose(1, 0, 2, 3)


if __name__ == "__main__":
    key = jax.random.PRNGKey(0)
    k_x, k_w = jax.random.split(key)

    # Input consistent with Conv2d(in_channels=1): NCHW, small spatial size.
    x = jax.random.normal(k_x, (2, 1, 16, 16), dtype=jnp.float32)

    # Deterministic parameter init (shapes from the module's __init__).
    fan_in = 1 * 3 * 3
    bound = (1.0 / fan_in) ** 0.5
    conv_w = jax.random.uniform(k_w, (32, 1, 3, 3), jnp.float32, -bound, bound)
    gamma = jnp.ones((32,), jnp.float32)   # BatchNorm2d default affine init
    beta = jnp.zeros((32,), jnp.float32)

    out = block_forward(x, conv_w, gamma, beta)
    jax.block_until_ready(out)
    assert out.shape == (2, 32, 14, 14), out.shape

    # Pure-JAX reference: conv -> training-mode BN (biased var) -> ReLU.
    conv_ref = jax.lax.conv_general_dilated(
        x, conv_w, window_strides=(1, 1), padding="VALID",
        dimension_numbers=("NCHW", "OIHW", "NCHW"))
    mean = conv_ref.mean(axis=(0, 2, 3), keepdims=True)
    var = ((conv_ref - mean) ** 2).mean(axis=(0, 2, 3), keepdims=True)
    ref = jnp.maximum(
        (conv_ref - mean) * jax.lax.rsqrt(var + BN_EPS)
        * gamma.reshape(1, -1, 1, 1) + beta.reshape(1, -1, 1, 1), 0.0)
    err = float(jnp.max(jnp.abs(out - ref)))
    assert err < 5e-3, f"max abs err vs reference: {err}"

    print("KERNEL_OK")
</pallas_src>

<mosaic_0001>
module attributes {stable_mosaic.version = 11 : i64} {
  func.func @block_kernel(%arg0: memref<32x9xf32, #tpu.memory_space<vmem>>, %arg1: memref<9x512xf32, #tpu.memory_space<vmem>>, %arg2: memref<32x1xf32, #tpu.memory_space<vmem>>, %arg3: memref<32x1xf32, #tpu.memory_space<vmem>>, %arg4: memref<32x512xf32, #tpu.memory_space<vmem>>) attributes {dimension_semantics = [], scalar_prefetch = 0 : i64, scratch_operands = 0 : i64, tpu.core_type = #tpu.core_type<tc>} {
    %c0 = arith.constant 0 : index
    %c0_0 = arith.constant 0 : index
    %0 = vector.load %arg0[%c0, %c0_0] : memref<32x9xf32, #tpu.memory_space<vmem>>, vector<32x9xf32>
    %c0_1 = arith.constant 0 : index
    %c0_2 = arith.constant 0 : index
    %1 = vector.load %arg1[%c0_1, %c0_2] : memref<9x512xf32, #tpu.memory_space<vmem>>, vector<9x512xf32>
    %cst = arith.constant dense<0.000000e+00> : vector<32x512xf32>
    %2 = tpu.matmul %0, %1, %cst {dimension_numbers = #tpu.dot_dimension_numbers<[1], [0], [0], [1], [0, 0, 1, 1], [], []>} : vector<32x9xf32>, vector<9x512xf32>, vector<32x512xf32> -> vector<32x512xf32>
    %cst_3 = arith.constant dense<0.000000e+00> : vector<32xf32>
    %3 = vector.multi_reduction <add>, %2, %cst_3 [1] : vector<32x512xf32> to vector<32xf32>
    %4 = vector.shape_cast %3 : vector<32xf32> to vector<32x1xf32>
    %cst_4 = arith.constant 0.00255102036 : f32
    %5 = vector.broadcast %cst_4 : f32 to vector<32x1xf32>
    %6 = arith.mulf %4, %5 : vector<32x1xf32>
    %7 = tpu.iota {dimensions = array<i32: 1>} : vector<32x512xi32>
    %c392_i32 = arith.constant 392 : i32
    %8 = vector.broadcast %c392_i32 : i32 to vector<32x512xi32>
    %9 = arith.cmpi slt, %7, %8 : vector<32x512xi32>
    %10 = vector.broadcast %6 : vector<32x1xf32> to vector<32x512xf32>
    %11 = arith.subf %2, %10 : vector<32x512xf32>
    %cst_5 = arith.constant 0.000000e+00 : f32
    %12 = vector.broadcast %cst_5 : f32 to vector<32x512xf32>
    %13 = arith.select %9, %11, %12 : vector<32x512xi1>, vector<32x512xf32>
    %14 = arith.mulf %13, %13 : vector<32x512xf32>
    %cst_6 = arith.constant dense<0.000000e+00> : vector<32xf32>
    %15 = vector.multi_reduction <add>, %14, %cst_6 [1] : vector<32x512xf32> to vector<32xf32>
    %16 = vector.shape_cast %15 : vector<32xf32> to vector<32x1xf32>
    %cst_7 = arith.constant 0.00255102036 : f32
    %17 = vector.broadcast %cst_7 : f32 to vector<32x1xf32>
    %18 = arith.mulf %16, %17 : vector<32x1xf32>
    %c0_8 = arith.constant 0 : index
    %c0_9 = arith.constant 0 : index
    %19 = vector.load %arg2[%c0_8, %c0_9] : memref<32x1xf32, #tpu.memory_space<vmem>>, vector<32x1xf32>
    %cst_10 = arith.constant 9.99999974E-6 : f32
    %20 = vector.broadcast %cst_10 : f32 to vector<32x1xf32>
    %21 = arith.addf %18, %20 : vector<32x1xf32>
    %22 = math.rsqrt %21 : vector<32x1xf32>
    %23 = arith.mulf %19, %22 : vector<32x1xf32>
    %c0_11 = arith.constant 0 : index
    %c0_12 = arith.constant 0 : index
    %24 = vector.load %arg3[%c0_11, %c0_12] : memref<32x1xf32, #tpu.memory_space<vmem>>, vector<32x1xf32>
    %25 = arith.mulf %6, %23 : vector<32x1xf32>
    %26 = arith.subf %24, %25 : vector<32x1xf32>
    %27 = vector.broadcast %23 : vector<32x1xf32> to vector<32x512xf32>
    %28 = arith.mulf %2, %27 : vector<32x512xf32>
    %29 = vector.broadcast %26 : vector<32x1xf32> to vector<32x512xf32>
    %30 = arith.addf %28, %29 : vector<32x512xf32>
    %cst_13 = arith.constant 0.000000e+00 : f32
    %31 = vector.broadcast %cst_13 : f32 to vector<32x512xf32>
    %32 = arith.maximumf %30, %31 : vector<32x512xf32>
    %c0_14 = arith.constant 0 : index
    %c0_15 = arith.constant 0 : index
    %33 = vector.load %arg4[%c0_14, %c0_15] : memref<32x512xf32, #tpu.memory_space<vmem>>, vector<32x512xf32>
    tpu.vector_store %arg4[%c0_14, %c0_15], %32 {strides = array<i32>} : memref<32x512xf32, #tpu.memory_space<vmem>>, vector<32x512xf32>,
    return
  }
}

</mosaic_0001>

<llo_original>
// kernel: tpu_custom_call.1
$region0: #{tpu_custom_call.1}
  #allocation0 [shape = 'u32[]', space=smem, size = 0x4, offset = 0x4, fixed_abs, tag = 'smem constant byte address 0x4 - core index']
  #allocation1 [shape = 'u32[144,128]{1,0:T(1,128)}', space=vmem, size = 0x12000, scoped, tag = 'internal scratch']
  %s0 = inlined_call_operand.vmem [shape: f32[32,9], index: 0, kind: input, shape index: {}]
  %s1 = inlined_call_operand.vmem [shape: f32[9,512], index: 1, kind: input, shape index: {}]
  %s2 = inlined_call_operand.vmem [shape: f32[32,1], index: 2, kind: input, shape index: {}]
  %s3 = inlined_call_operand.vmem [shape: f32[32,1], index: 3, kind: input, shape index: {}]
  %s4 = inlined_call_operand.hbm [shape: f32[32,512], index: 4, kind: output, shape index: {}]
  %s5 = sld [smem:[#allocation0]]
  $region26: #{tpu_custom_call.1} parent=0
    _
  %s7 = ssub.s32 1, %s5
  %s8 = scalar_select 0, %s7, %s5
  $region1: #{tpu_custom_call.1} parent=0
    #allocation2 [shape = 'u8[65536]{0}', space=vmem, size = 0x10000, scoped, tag = 'output window, operand 0, single buffered']
    #allocation3 [shape = 's32[1]{0}', space=sflag, size = 0x4, scoped, tag = 'scoped memory for tpu_custom_call.1']
    %9 = vsyncpa [#allocation3], 0
    // Predicated region
    $region2: #{tpu_custom_call.1} parent=1 // pred_check
      _
    $region3: #{tpu_custom_call.1} parent=1 // pred_check_branch
      %11 = sbr.rel (0) target = $region5
    $region4: #{tpu_custom_call.1} parent=1 // pred_region
      _
    $region5: #{tpu_custom_call.1} parent=1 // pred_fallthru
      _
    // Predicated region
    $region6: #{tpu_custom_call.1} parent=1 // pred_check
      _
    $region7: #{tpu_custom_call.1} parent=1 // pred_check_branch
      %13 = sbr.rel (0) target = $region9
    $region8: #{tpu_custom_call.1} parent=1 // pred_region
      _
    $region9: #{tpu_custom_call.1} parent=1 // pred_fallthru
      _
    // Predicated region
    $region10: #{tpu_custom_call.1} parent=1 // pred_check
      _
    $region11: #{tpu_custom_call.1} parent=1 // pred_check_branch
      %15 = sbr.rel (0) target = $region13
    $region12: #{tpu_custom_call.1} parent=1 // pred_region
      _
    $region13: #{tpu_custom_call.1} parent=1 // pred_fallthru
      _
    // Predicated region
    $region14: #{tpu_custom_call.1} parent=1 // pred_check
      _
    $region15: #{tpu_custom_call.1} parent=1 // pred_check_branch
      %17 = sbr.rel (0) target = $region17
    $region16: #{tpu_custom_call.1} parent=1 // pred_region
      _
    $region17: #{tpu_custom_call.1} parent=1 // pred_fallthru
      _
    %v18 = vld [vmem:[%s0] sm:$0xff]
    %v19 = vld [vmem:[%s0 + $0x8] sm:$0xff]
    %v20 = vld [vmem:[%s0 + $0x10] sm:$0xff]
    %v21 = vld [vmem:[%s0 + $0x18] sm:$0xff]
    %v22 = vld [vmem:[%s1] sm:$0xff]
    %v23 = vld [vmem:[%s1 + $0x8] sm:$0xff]
    %v24 = vld [vmem:[%s1 + $0x10] sm:$0xff]
    %v25 = vld [vmem:[%s1 + $0x18] sm:$0xff]
    %v26 = vld [vmem:[%s1 + $0x20] sm:$0x1]
    %v27 = vld [vmem:[%s1 + $0x28] sm:$0x1]
    %v28 = vld [vmem:[%s1 + $0x30] sm:$0x1]
    %v29 = vld [vmem:[%s1 + $0x38] sm:$0x1]
    %vm30 = vcmask 72704
    %v32 = vsel %vm30, %v18, 0
    %v35 = vsel %vm30, %v19, 0
    %v38 = vsel %vm30, %v20, 0
    %v41 = vsel %vm30, %v21, 0
    %vm43 = vcmask 1040384
    %v45 = vsel %vm43, %v26, 0
    %v48 = vsel %vm43, %v27, 0
    %v51 = vsel %vm43, %v28, 0
    %v54 = vsel %vm43, %v29, 0
    %56 = vmatprep.subr.mxu0 0.0
    %57 = vmatpush1.msra.mxu0 0.0
    %58 = vmatprep.subr.mxu0 0.0
    %59 = vmatpush1.msra.mxu0 0.0
    %60 = vmatprep.subr.mxu0 0.0
    %61 = vmatpush1.msra.mxu0 0.0
    %62 = vmatprep.subr.mxu0 0.0
    %63 = vmatpush1.msra.mxu0 0.0
    %64 = vmatprep.subr.mxu0 0.0
    %65 = vmatpush1.msra.mxu0 0.0
    %66 = vmatprep.subr.mxu0 0.0
    %67 = vmatpush1.msra.mxu0 0.0
    %68 = vmatprep.subr.mxu0 0.0
    %69 = vmatpush1.msra.mxu0 0.0
    %70 = vmatprep.subr.mxu0 0.0
    %71 = vmatpush1.msra.mxu0 0.0
    %72 = vmatprep.subr.mxu0 0.0
    %73 = vmatpush1.msra.mxu0 0.0
    %74 = vmatprep.subr.mxu0 0.0
    %75 = vmatpush1.msra.mxu0 0.0
    %76 = vmatprep.subr.mxu0 0.0
    %77 = vmatpush1.msra.mxu0 0.0
    %78 = vmatprep.subr.mxu0 0.0
    %79 = vmatpush1.msra.mxu0 0.0
    %80 = vmatprep.subr.mxu0 0.0
    %81 = vmatpush1.msra.mxu0 0.0
    %82 = vmatprep.subr.mxu0 0.0
    %83 = vmatpush1.msra.mxu0 0.0
    %84 = vmatprep.subr.mxu0 %v48
    %85 = vmatpush1.msra.mxu0 %v45
    %86 = vmatprep.subr.mxu0 %v23
    %87 = vmatpush1.msra.mxu0 %v22
    %88 = vmatprep.subr.mxu0 0.0
    %89 = vmatpush2.msra.mxu0 0.0
    %90 = vmatprep.subr.mxu0 0.0
    %91 = vmatpush2.msra.mxu0 0.0
    %92 = vmatprep.subr.mxu0 0.0
    %93 = vmatpush2.msra.mxu0 0.0
    %94 = vmatprep.subr.mxu0 0.0
    %95 = vmatpush2.msra.mxu0 0.0
    %96 = vmatprep.subr.mxu0 0.0
    %97 = vmatpush2.msra.mxu0 0.0
    %98 = vmatprep.subr.mxu0 0.0
    %99 = vmatpush2.msra.mxu0 0.0
    %100 = vmatprep.subr.mxu0 0.0
    %101 = vmatpush2.msra.mxu0 0.0
    %102 = vmatprep.subr.mxu0 0.0
    %103 = vmatpush2.msra.mxu0 0.0
    %104 = vmatprep.subr.mxu0 0.0
    %105 = vmatpush2.msra.mxu0 0.0
    %106 = vmatprep.subr.mxu0 0.0
    %107 = vmatpush2.msra.mxu0 0.0
    %108 = vmatprep.subr.mxu0 0.0
    %109 = vmatpush2.msra.mxu0 0.0
    %110 = vmatprep.subr.mxu0 0.0
    %111 = vmatpush2.msra.mxu0 0.0
    %112 = vmatprep.subr.mxu0 0.0
    %113 = vmatpush2.msra.mxu0 0.0
    %114 = vmatprep.subr.mxu0 0.0
    %115 = vmatpush2.msra.mxu0 0.0
    %116 = vmatprep.subr.mxu0 0.0
    %117 = vmatpush2.msra.mxu0 0.0
    %118 = vmatprep.subr.mxu0 0.0
    %119 = vmatpush2.msra.mxu0 0.0
    %120 = vmatprep.mubr.f32.mxu0 0.0
    %121 = vmatmul.mubr.f32.gmra.mxu0 %v32
    %v122 = vpop.f32.mrf.mxu0
    %v123 = vadd.f32 0.0, %v122
    %v124 = vpop.f32.mrf.mxu0
    %v125 = vadd.f32 0.0, %v124
    %126 = vmatprep.mubr.f32.mxu0 0.0
    %127 = vmatmul.mubr.f32.gmra.mxu0 %v35
    %v128 = vpop.f32.mrf.mxu0
    %v129 = vadd.f32 0.0, %v128
    %v130 = vpop.f32.mrf.mxu0
    %v131 = vadd.f32 0.0, %v130
    %132 = vmatprep.mubr.f32.mxu0 0.0
    %133 = vmatmul.mubr.f32.gmra.mxu0 %v38
    %v134 = vpop.f32.mrf.mxu0
    %v135 = vadd.f32 0.0, %v134
    %v136 = vpop.f32.mrf.mxu0
    %v137 = vadd.f32 0.0, %v136
    %138 = vmatprep.mubr.f32.mxu0 0.0
    %139 = vmatmul.mubr.f32.gmra.mxu0 %v41
    %v140 = vpop.f32.mrf.mxu0
    %v141 = vadd.f32 0.0, %v140
    %v142 = vpop.f32.mrf.mxu0
    %v143 = vadd.f32 0.0, %v142
    %144 = vdwg.mxu0
    %145 = vmatprep.subr.mxu0 0.0
    %146 = vmatpush1.msra.mxu0 0.0
    %147 = vmatprep.subr.mxu0 0.0
    %148 = vmatpush1.msra.mxu0 0.0
    %149 = vmatprep.subr.mxu0 0.0
    %150 = vmatpush1.msra.mxu0 0.0
    %151 = vmatprep.subr.mxu0 0.0
    %152 = vmatpush1.msra.mxu0 0.0
    %153 = vmatprep.subr.mxu0 0.0
    %154 = vmatpush1.msra.mxu0 0.0
    %155 = vmatprep.subr.mxu0 0.0
    %156 = vmatpush1.msra.mxu0 0.0
    %157 = vmatprep.subr.mxu0 0.0
    %158 = vmatpush1.msra.mxu0 0.0
    %159 = vmatprep.subr.mxu0 0.0
    %160 = vmatpush1.msra.mxu0 0.0
    %161 = vmatprep.subr.mxu0 0.0
    %162 = vmatpush1.msra.mxu0 0.0
    %163 = vmatprep.subr.mxu0 0.0
    %164 = vmatpush1.msra.mxu0 0.0
    %165 = vmatprep.subr.mxu0 0.0
    %166 = vmatpush1.msra.mxu0 0.0
    %167 = vmatprep.subr.mxu0 0.0
    %168 = vmatpush1.msra.mxu0 0.0
    %169 = vmatprep.subr.mxu0 0.0
    %170 = vmatpush1.msra.mxu0 0.0
    %171 = vmatprep.subr.mxu0 0.0
    %172 = vmatpush1.msra.mxu0 0.0
    %173 = vmatprep.subr.mxu0 %v54
    %174 = vmatpush1.msra.mxu0 %v51
    %175 = vmatprep.subr.mxu0 %v25
    %176 = vmatpush1.msra.mxu0 %v24
    %177 = vmatprep.subr.mxu0 0.0
    %178 = vmatpush2.msra.mxu0 0.0
    %179 = vmatprep.subr.mxu0 0.0
    %180 = vmatpush2.msra.mxu0 0.0
    %181 = vmatprep.subr.mxu0 0.0
    %182 = vmatpush2.msra.mxu0 0.0
    %183 = vmatprep.subr.mxu0 0.0
    %184 = vmatpush2.msra.mxu0 0.0
    %185 = vmatprep.subr.mxu0 0.0
    %186 = vmatpush2.msra.mxu0 0.0
    %187 = vmatprep.subr.mxu0 0.0
    %188 = vmatpush2.msra.mxu0 0.0
    %189 = vmatprep.subr.mxu0 0.0
    %190 = vmatpush2.msra.mxu0 0.0
    %191 = vmatprep.subr.mxu0 0.0
    %192 = vmatpush2.msra.mxu0 0.0
    %193 = vmatprep.subr.mxu0 0.0
    %194 = vmatpush2.msra.mxu0 0.0
    %195 = vmatprep.subr.mxu0 0.0
    %196 = vmatpush2.msra.mxu0 0.0
    %197 = vmatprep.subr.mxu0 0.0
    %198 = vmatpush2.msra.mxu0 0.0
    %199 = vmatprep.subr.mxu0 0.0
    %200 = vmatpush2.msra.mxu0 0.0
    %201 = vmatprep.subr.mxu0 0.0
    %202 = vmatpush2.msra.mxu0 0.0
    %203 = vmatprep.subr.mxu0 0.0
    %204 = vmatpush2.msra.mxu0 0.0
    %205 = vmatprep.subr.mxu0 0.0
    %206 = vmatpush2.msra.mxu0 0.0
    %207 = vmatprep.subr.mxu0 0.0
    %208 = vmatpush2.msra.mxu0 0.0
    %209 = vmatprep.mubr.f32.mxu0 0.0
    %210 = vmatmul.mubr.f32.gmra.mxu0 %v32
    %v211 = vpop.f32.mrf.mxu0
    %v212 = vadd.f32 0.0, %v211
    %v213 = vpop.f32.mrf.mxu0
    %v214 = vadd.f32 0.0, %v213
    %215 = vmatprep.mubr.f32.mxu0 0.0
    %216 = vmatmul.mubr.f32.gmra.mxu0 %v35
    %v217 = vpop.f32.mrf.mxu0
    %v218 = vadd.f32 0.0, %v217
    %v219 = vpop.f32.mrf.mxu0
    %v220 = vadd.f32 0.0, %v219
    %221 = vmatprep.mubr.f32.mxu0 0.0
    %222 = vmatmul.mubr.f32.gmra.mxu0 %v38
    %v223 = vpop.f32.mrf.mxu0
    %v224 = vadd.f32 0.0, %v223
    %v225 = vpop.f32.mrf.mxu0
    %v226 = vadd.f32 0.0, %v225
    %227 = vmatprep.mubr.f32.mxu0 0.0
    %228 = vmatmul.mubr.f32.gmra.mxu0 %v41
    %v229 = vpop.f32.mrf.mxu0
    %v230 = vadd.f32 0.0, %v229
    %v231 = vpop.f32.mrf.mxu0
    %v232 = vadd.f32 0.0, %v231
    %233 = vdwg.mxu0
    %v234 = vadd.f32 %v123, %v125
    %v235 = vadd.f32 %v234, %v212
    %v236 = vadd.f32 %v235, %v214
    %237 = vadd.xlane.f32.xlu0 %v236
    %v238 = vpop.xlane.xlu0 %237
    %v239 = vadd.f32 %v129, %v131
    %v240 = vadd.f32 %v239, %v218
    %v241 = vadd.f32 %v240, %v220
    %242 = vadd.xlane.f32.xlu0 %v241
    %v243 = vpop.xlane.xlu0 %242
    %v244 = vadd.f32 %v135, %v137
    %v245 = vadd.f32 %v244, %v224
    %v246 = vadd.f32 %v245, %v226
    %247 = vadd.xlane.f32.xlu0 %v246
    %v248 = vpop.xlane.xlu0 %247
    %v249 = vadd.f32 %v141, %v143
    %v250 = vadd.f32 %v249, %v230
    %v251 = vadd.f32 %v250, %v232
    %252 = vadd.xlane.f32.xlu0 %v251
    %v253 = vpop.xlane.xlu0 %252
    %v254 = vmul.f32 %v238, 0.0025510204
    %v255 = vmul.f32 %v243, 0.0025510204
    %v256 = vmul.f32 %v248, 0.0025510204
    %v257 = vmul.f32 %v253, 0.0025510204
    %v258 = vlaneseq
    %v259 = vand.u32 %v258, 127
    %v260 = vadd.s32 %v259, 128
    %v261 = vadd.s32 %v259, 256
    %v262 = vadd.s32 %v259, 384
    %vm263 = vcmp.lt.s32.totalorder %v259, 392
    %vm264 = vcmp.lt.s32.totalorder %v260, 392
    %vm265 = vcmp.lt.s32.totalorder %v261, 392
    %vm266 = vcmp.lt.s32.totalorder %v262, 392
    %v267 = vsub.f32 %v123, %v254
    %v268 = vsub.f32 %v125, %v254
    %v269 = vsub.f32 %v212, %v254
    %v270 = vsub.f32 %v214, %v254
    %v271 = vsub.f32 %v129, %v255
    %v272 = vsub.f32 %v131, %v255
    %v273 = vsub.f32 %v218, %v255
    %v274 = vsub.f32 %v220, %v255
    %v275 = vsub.f32 %v135, %v256
    %v276 = vsub.f32 %v137, %v256
    %v277 = vsub.f32 %v224, %v256
    %v278 = vsub.f32 %v226, %v256
    %v279 = vsub.f32 %v141, %v257
    %v280 = vsub.f32 %v143, %v257
    %v281 = vsub.f32 %v230, %v257
    %v282 = vsub.f32 %v232, %v257
    %v283 = vsel %vm263, %v267, 0.0
    %v284 = vsel %vm264, %v268, 0.0
    %v285 = vsel %vm265, %v269, 0.0
    %v286 = vsel %vm266, %v270, 0.0
    %v287 = vsel %vm263, %v271, 0.0
    %v288 = vsel %vm264, %v272, 0.0
    %v289 = vsel %vm265, %v273, 0.0
    %v290 = vsel %vm266, %v274, 0.0
    %v291 = vsel %vm263, %v275, 0.0
    %v292 = vsel %vm264, %v276, 0.0
    %v293 = vsel %vm265, %v277, 0.0
    %v294 = vsel %vm266, %v278, 0.0
    %v295 = vsel %vm263, %v279, 0.0
    %v296 = vsel %vm264, %v280, 0.0
    %v297 = vsel %vm265, %v281, 0.0
    %v298 = vsel %vm266, %v282, 0.0
    %v299 = vmul.f32 %v283, %v283
    %v300 = vmul.f32 %v284, %v284
    %v301 = vmul.f32 %v285, %v285
    %v302 = vmul.f32 %v286, %v286
    %v303 = vmul.f32 %v287, %v287
    %v304 = vmul.f32 %v288, %v288
    %v305 = vmul.f32 %v289, %v289
    %v306 = vmul.f32 %v290, %v290
    %v307 = vmul.f32 %v291, %v291
    %v308 = vmul.f32 %v292, %v292
    %v309 = vmul.f32 %v293, %v293
    %v310 = vmul.f32 %v294, %v294
    %v311 = vmul.f32 %v295, %v295
    %v312 = vmul.f32 %v296, %v296
    %v313 = vmul.f32 %v297, %v297
    %v314 = vmul.f32 %v298, %v298
    %v315 = vadd.f32 %v299, %v300
    %v316 = vadd.f32 %v315, %v301
    %v317 = vadd.f32 %v316, %v302
    %318 = vadd.xlane.f32.xlu0 %v317
    %v319 = vpop.xlane.xlu0 %318
    %v320 = vadd.f32 %v303, %v304
    %v321 = vadd.f32 %v320, %v305
    %v322 = vadd.f32 %v321, %v306
    %323 = vadd.xlane.f32.xlu0 %v322
    %v324 = vpop.xlane.xlu0 %323
    %v325 = vadd.f32 %v307, %v308
    %v326 = vadd.f32 %v325, %v309
    %v327 = vadd.f32 %v326, %v310
    %328 = vadd.xlane.f32.xlu0 %v327
    %v329 = vpop.xlane.xlu0 %328
    %v330 = vadd.f32 %v311, %v312
    %v331 = vadd.f32 %v330, %v313
    %v332 = vadd.f32 %v331, %v314
    %333 = vadd.xlane.f32.xlu0 %v332
    %v334 = vpop.xlane.xlu0 %333
    %v335 = vmul.f32 %v319, 0.0025510204
    %v336 = vmul.f32 %v324, 0.0025510204
    %v337 = vmul.f32 %v329, 0.0025510204
    %v338 = vmul.f32 %v334, 0.0025510204
    %v339 = vld [vmem:[%s2] sm:$0xff]
    %v340 = vld [vmem:[%s2 + $0x8] sm:$0xff]
    %v341 = vld [vmem:[%s2 + $0x10] sm:$0xff]
    %v342 = vld [vmem:[%s2 + $0x18] sm:$0xff]
    %v343 = vadd.f32 %v335, 1e-05
    %v344 = vadd.f32 %v336, 1e-05
    %v345 = vadd.f32 %v337, 1e-05
    %v346 = vadd.f32 %v338, 1e-05
    %v347 = vrsqrt.pop %v343
    %v348 = vrsqrt.pop %v344
    %v349 = vrsqrt.pop %v345
    %v350 = vrsqrt.pop %v346
    %v351 = vmul.f32 %v339, %v347
    %v352 = vmul.f32 %v340, %v348
    %v353 = vmul.f32 %v341, %v349
    %v354 = vmul.f32 %v342, %v350
    %v355 = vld [vmem:[%s3] sm:$0xff]
    %v356 = vld [vmem:[%s3 + $0x8] sm:$0xff]
    %v357 = vld [vmem:[%s3 + $0x10] sm:$0xff]
    %v358 = vld [vmem:[%s3 + $0x18] sm:$0xff]
    %v359 = vmul.f32 %v254, %v351
    %v360 = vmul.f32 %v255, %v352
    %v361 = vmul.f32 %v256, %v353
    %v362 = vmul.f32 %v257, %v354
    %v363 = vsub.f32 %v355, %v359
    %v364 = vsub.f32 %v356, %v360
    %v365 = vsub.f32 %v357, %v361
    %v366 = vsub.f32 %v358, %v362
    %368 = vset.pattern.permute.xlu0 0
    %369 = vperm.xlu0 %368, %v351
    %v370 = vpop.permute.xlu0 %369
    %373 = vset.pattern.permute.xlu0 0
    %374 = vperm.xlu0 %373, %v352
    %v375 = vpop.permute.xlu0 %374
    %378 = vset.pattern.permute.xlu0 0
    %379 = vperm.xlu0 %378, %v353
    %v380 = vpop.permute.xlu0 %379
    %383 = vset.pattern.permute.xlu0 0
    %384 = vperm.xlu0 %383, %v354
    %v385 = vpop.permute.xlu0 %384
    %v387 = vmul.f32 %v123, %v370
    %v388 = vmul.f32 %v125, %v370
    %v389 = vmul.f32 %v212, %v370
    %v390 = vmul.f32 %v214, %v370
    %v391 = vmul.f32 %v129, %v375
    %v392 = vmul.f32 %v131, %v375
    %v393 = vmul.f32 %v218, %v375
    %v394 = vmul.f32 %v220, %v375
    %v395 = vmul.f32 %v135, %v380
    %v396 = vmul.f32 %v137, %v380
    %v397 = vmul.f32 %v224, %v380
    %v398 = vmul.f32 %v226, %v380
    %v399 = vmul.f32 %v141, %v385
    %v400 = vmul.f32 %v143, %v385
    %v401 = vmul.f32 %v230, %v385
    %v402 = vmul.f32 %v232, %v385
    %404 = vset.pattern.permute.xlu0 0
    %405 = vperm.xlu0 %404, %v363
    %v406 = vpop.permute.xlu0 %405
    %409 = vset.pattern.permute.xlu0 0
    %410 = vperm.xlu0 %409, %v364
    %v411 = vpop.permute.xlu0 %410
    %414 = vset.pattern.permute.xlu0 0
    %415 = vperm.xlu0 %414, %v365
    %v416 = vpop.permute.xlu0 %415
    %419 = vset.pattern.permute.xlu0 0
    %420 = vperm.xlu0 %419, %v366
    %v421 = vpop.permute.xlu0 %420
    %v423 = vadd.f32 %v387, %v406
    %v424 = vadd.f32 %v388, %v406
    %v425 = vadd.f32 %v389, %v406
    %v426 = vadd.f32 %v390, %v406
    %v427 = vadd.f32 %v391, %v411
    %v428 = vadd.f32 %v392, %v411
    %v429 = vadd.f32 %v393, %v411
    %v430 = vadd.f32 %v394, %v411
    %v431 = vadd.f32 %v395, %v416
    %v432 = vadd.f32 %v396, %v416
    %v433 = vadd.f32 %v397, %v416
    %v434 = vadd.f32 %v398, %v416
    %v435 = vadd.f32 %v399, %v421
    %v436 = vadd.f32 %v400, %v421
    %v437 = vadd.f32 %v401, %v421
    %v438 = vadd.f32 %v402, %v421
    %v439 = vmax.f32 %v423, 0.0
    %v440 = vmax.f32 %v424, 0.0
    %v441 = vmax.f32 %v425, 0.0
    %v442 = vmax.f32 %v426, 0.0
    %v443 = vmax.f32 %v427, 0.0
    %v444 = vmax.f32 %v428, 0.0
    %v445 = vmax.f32 %v429, 0.0
    %v446 = vmax.f32 %v430, 0.0
    %v447 = vmax.f32 %v431, 0.0
    %v448 = vmax.f32 %v432, 0.0
    %v449 = vmax.f32 %v433, 0.0
    %v450 = vmax.f32 %v434, 0.0
    %v451 = vmax.f32 %v435, 0.0
    %v452 = vmax.f32 %v436, 0.0
    %v453 = vmax.f32 %v437, 0.0
    %v454 = vmax.f32 %v438, 0.0
    %455 = vst [vmem:[#allocation2] sm:$0xff] %v439
    %456 = vst [vmem:[#allocation2 + $0x8] sm:$0xff] %v440
    %457 = vst [vmem:[#allocation2 + $0x10] sm:$0xff] %v441
    %458 = vst [vmem:[#allocation2 + $0x18] sm:$0xff] %v442
    %459 = vst [vmem:[#allocation2 + $0x20] sm:$0xff] %v443
    %460 = vst [vmem:[#allocation2 + $0x28] sm:$0xff] %v444
    %461 = vst [vmem:[#allocation2 + $0x30] sm:$0xff] %v445
    %462 = vst [vmem:[#allocation2 + $0x38] sm:$0xff] %v446
    %463 = vst [vmem:[#allocation2 + $0x40] sm:$0xff] %v447
    %464 = vst [vmem:[#allocation2 + $0x48] sm:$0xff] %v448
    %465 = vst [vmem:[#allocation2 + $0x50] sm:$0xff] %v449
    %466 = vst [vmem:[#allocation2 + $0x58] sm:$0xff] %v450
    %467 = vst [vmem:[#allocation2 + $0x60] sm:$0xff] %v451
    %468 = vst [vmem:[#allocation2 + $0x68] sm:$0xff] %v452
    %469 = vst [vmem:[#allocation2 + $0x70] sm:$0xff] %v453
    %470 = vst [vmem:[#allocation2 + $0x78] sm:$0xff] %v454
    // Predicated region
    $region18: #{tpu_custom_call.1} parent=1 // pred_check
      _
    $region19: #{tpu_custom_call.1} parent=1 // pred_check_branch
      %472 = sbr.rel (0) target = $region21
    $region20: #{tpu_custom_call.1} parent=1 // pred_region
      %s474 = ssub.s32 2048, 2048
      %475 = vsyncadd [#allocation3], %s474
      %s476 = sshll.u32 [#allocation2], 4
      %s477 = int_to_ptr.vmem [resolvable:$true] %s476
      %482 = dma.vmem_to_hbm [thread:$0]  %s477, 2048, %s4, [#allocation3], 512, 512, 32
    $region21: #{tpu_custom_call.1} parent=1 // pred_fallthru
      _
    // Predicated region
    $region22: #{tpu_custom_call.1} parent=1 // pred_check
      _
    $region23: #{tpu_custom_call.1} parent=1 // pred_check_branch
      %484 = sbr.rel (0) target = $region25
    $region24: #{tpu_custom_call.1} parent=1 // pred_region
      %485 = dma.done [#allocation3], 2048
    $region25: #{tpu_custom_call.1} parent=1 // pred_fallthru
      _
    %486 = vsyncpa [#allocation3], 1

</llo_original>
